<compile_context>
chip_gen: v5e
topology: v5e:2x2
jax: 0.10.0
libtpu: 0.0.40
codegen_flags: <defaults>
</compile_context>

<pallas_src>
import math

import jax
import jax.numpy as jnp
from jax.experimental import pallas as pl
from jax.experimental.pallas import tpu as pltpu

LN_EPS = 1e-12


def _layer_norm(x, gamma, beta):
    mu = jnp.mean(x, axis=-1, keepdims=True)
    var = jnp.mean((x - mu) ** 2, axis=-1, keepdims=True)
    return (x - mu) * jax.lax.rsqrt(var + LN_EPS) * gamma + beta


def gloss_encoder_kernel(x_ref, mask_ref, wqkv_ref, wo_ref, w1_ref, w2_ref,
                         vecs_ref, out_ref):
    """One encoder layer + CLS pooling for a block of BB examples."""
    x = x_ref[...]                     # (BB, S, H)
    mask = mask_ref[...]               # (BB, 1, S), 1.0 = keep, 0.0 = pad
    BB, S, H = x.shape
    F = w1_ref.shape[-1]
    scale = 1.0 / math.sqrt(H)         # single attention head of width H

    vecs = vecs_ref[...]               # (8, 3H) packed bias / layernorm vectors
    b_qkv = vecs[0:1, :]               # (1, 3H)
    b_o = vecs[1:2, :H]
    ln1_g = vecs[2:3, :H]
    ln1_b = vecs[3:4, :H]
    b_1 = vecs[4:5, :F]
    b_2 = vecs[5:6, :H]
    ln2_g = vecs[6:7, :H]
    ln2_b = vecs[7:8, :H]

    # Fused Q/K/V projection: one (BB*S, H) x (H, 3H) MXU push instead of three.
    x2 = x.reshape(BB * S, H)
    qkv = jnp.dot(x2, wqkv_ref[...], preferred_element_type=jnp.float32) + b_qkv
    qkv = qkv.reshape(BB, S, 3 * H)

    q_cls = qkv[:, 0:1, 0:H]           # (BB, 1, H) — only the CLS query is needed
    k = qkv[:, :, H:2 * H]             # (BB, S, H)
    v = qkv[:, :, 2 * H:3 * H]         # (BB, S, H)

    # Batched attention for the CLS query (no per-head lane splits / transposes).
    scores = jnp.einsum('bqd,bkd->bqk', q_cls, k,
                        preferred_element_type=jnp.float32) * scale   # (BB, 1, S)
    scores = scores + (-1e9) * (1.0 - mask)        # additive key mask
    m = jnp.max(scores, axis=-1, keepdims=True)
    p = jnp.exp(scores - m)
    p = p * pl.reciprocal(jnp.sum(p, axis=-1, keepdims=True), approx=True)
    ctx = jnp.einsum('bqk,bkd->bqd', p, v,
                     preferred_element_type=jnp.float32)              # (BB, 1, H)
    ctx = ctx.reshape(BB, H)

    x_cls = x[:, 0, :]                 # (BB, H)
    attn_out = jnp.dot(ctx, wo_ref[...], preferred_element_type=jnp.float32) + b_o
    y = _layer_norm(x_cls + attn_out, ln1_g, ln1_b)

    # FFN + second layernorm only for the CLS row (downstream uses only [:, 0, :]).
    h1 = jnp.dot(y, w1_ref[...], preferred_element_type=jnp.float32) + b_1
    h1 = jax.nn.gelu(h1, approximate=True)
    # TODO(synk): HF BERT's default gelu is the exact erf form; tanh approx used here.
    ffn = jnp.dot(h1, w2_ref[...], preferred_element_type=jnp.float32) + b_2
    z = _layer_norm(y + ffn, ln2_g, ln2_b)

    out_ref[0] = z.astype(out_ref.dtype)           # (BB, H)


def gloss_encoder_forward(input_ids, attn_mask, params):
    """Mirrors GlossEncoder.forward(input_ids, attn_mask, output_mask=None)."""
    # ---- embedding glue (plain JAX) ----
    tok = params["tok_emb"][input_ids]             # (B, S, H)
    pos = params["pos_emb"][None, :, :]            # (1, S, H)
    x = (tok + pos).astype(jnp.float32)
    B, S, H = x.shape
    F = params["w1"].shape[-1]
    assert F <= 3 * H, "packed vector array assumes FFN width <= 3*H"
    mask3 = attn_mask.astype(jnp.float32).reshape(B, 1, S)

    # ---- fuse / pack parameters: 5 weight inputs instead of 16 ----
    w_qkv = jnp.concatenate([params["wq"], params["wk"], params["wv"]], axis=1)  # (H, 3H)

    def _row(v, width=3 * H):
        v = jnp.asarray(v).reshape(1, -1)
        return jnp.pad(v, ((0, 0), (0, width - v.shape[1])))

    b_qkv = jnp.concatenate([params["bq"].reshape(-1), params["bk"].reshape(-1),
                             params["bv"].reshape(-1)])
    vecs = jnp.concatenate([
        _row(b_qkv), _row(params["bo"]),
        _row(params["ln1_g"]), _row(params["ln1_b"]),
        _row(params["b1"]), _row(params["b2"]),
        _row(params["ln2_g"]), _row(params["ln2_b"]),
    ], axis=0).astype(jnp.float32)                  # (8, 3H)

    # ---- batch blocking: at most 2 grid steps, "parallel" for v7x's 2 TCs ----
    num_blocks = 2 if (B >= 2 and B % 2 == 0) else 1
    BB = B // num_blocks

    hidden_cls = pl.pallas_call(
        gloss_encoder_kernel,
        out_shape=jax.ShapeDtypeStruct((num_blocks, BB, H), jnp.float32),
        grid_spec=pltpu.PrefetchScalarGridSpec(
            num_scalar_prefetch=0,
            grid=(num_blocks,),
            in_specs=[
                pl.BlockSpec((BB, S, H), lambda i: (i, 0, 0)),
                pl.BlockSpec((BB, 1, S), lambda i: (i, 0, 0)),
                pl.BlockSpec((H, 3 * H), lambda i: (0, 0)),
                pl.BlockSpec((H, H), lambda i: (0, 0)),
                pl.BlockSpec((H, F), lambda i: (0, 0)),
                pl.BlockSpec((F, H), lambda i: (0, 0)),
                pl.BlockSpec((8, 3 * H), lambda i: (0, 0)),
            ],
            out_specs=pl.BlockSpec((1, BB, H), lambda i: (i, 0, 0)),
        ),
        compiler_params=pltpu.CompilerParams(dimension_semantics=("parallel",)),
    )(x, mask3, w_qkv, params["wo"], params["w1"], params["w2"], vecs)

    # CLS pooling: matches gloss_output[:, 0, :].squeeze(dim=1)
    return hidden_cls.reshape(B, H)


def init_params(key, vocab=50, seq=8, hidden=32, ffn=64):
    ks = jax.random.split(key, 10)

    def w(k, shape, scale=0.02):
        return (scale * jax.random.normal(k, shape)).astype(jnp.float32)

    return {
        "tok_emb": w(ks[0], (vocab, hidden)),
        "pos_emb": w(ks[1], (seq, hidden)),
        "wq": w(ks[2], (hidden, hidden)), "bq": jnp.zeros((1, hidden), jnp.float32),
        "wk": w(ks[3], (hidden, hidden)), "bk": jnp.zeros((1, hidden), jnp.float32),
        "wv": w(ks[4], (hidden, hidden)), "bv": jnp.zeros((1, hidden), jnp.float32),
        "wo": w(ks[5], (hidden, hidden)), "bo": jnp.zeros((1, hidden), jnp.float32),
        "ln1_g": jnp.ones((1, hidden), jnp.float32),
        "ln1_b": jnp.zeros((1, hidden), jnp.float32),
        "w1": w(ks[6], (hidden, ffn)), "b1": jnp.zeros((1, ffn), jnp.float32),
        "w2": w(ks[7], (ffn, hidden)), "b2": jnp.zeros((1, hidden), jnp.float32),
        "ln2_g": jnp.ones((1, hidden), jnp.float32),
        "ln2_b": jnp.zeros((1, hidden), jnp.float32),
    }


if __name__ == "__main__":
    B, S, H, VOCAB = 2, 8, 32, 50
    root = jax.random.PRNGKey(0)
    k_params, k_ids = jax.random.split(root)

    params = init_params(k_params, vocab=VOCAB, seq=S, hidden=H, ffn=2 * H)
    input_ids = jax.random.randint(k_ids, (B, S), 0, VOCAB, dtype=jnp.int32)
    # second example has 2 padding tokens at the end
    attn_mask = jnp.array([[1] * S, [1] * (S - 2) + [0] * 2], dtype=jnp.float32)

    out = gloss_encoder_forward(input_ids, attn_mask, params)
    out = jax.block_until_ready(out)

    assert out.shape == (B, H), out.shape
    assert bool(jnp.all(jnp.isfinite(out)))
    print("KERNEL_OK")
</pallas_src>

<mosaic_0001>
module attributes {stable_mosaic.version = 11 : i64} {
  func.func @gloss_encoder_kernel(%arg0: i32, %arg1: memref<1x8x32xf32, #tpu.memory_space<vmem>>, %arg2: memref<1x1x8xf32, #tpu.memory_space<vmem>>, %arg3: memref<32x96xf32, #tpu.memory_space<vmem>>, %arg4: memref<32x32xf32, #tpu.memory_space<vmem>>, %arg5: memref<32x64xf32, #tpu.memory_space<vmem>>, %arg6: memref<64x32xf32, #tpu.memory_space<vmem>>, %arg7: memref<8x96xf32, #tpu.memory_space<vmem>>, %arg8: memref<1x1x32xf32, #tpu.memory_space<vmem>>) attributes {dimension_semantics = [#tpu.dimension_semantics<parallel>], iteration_bounds = array<i64: 2>, scalar_prefetch = 0 : i64, scratch_operands = 0 : i64, tpu.core_type = #tpu.core_type<tc>, window_params = [{transform_indices = @transform_0, window_bounds = array<i64: 1, 8, 32>}, {transform_indices = @transform_1, window_bounds = array<i64: 1, 1, 8>}, {pipeline_mode = #tpu.pipeline_mode<synchronous>, transform_indices = @transform_2, window_bounds = array<i64: 32, 96>}, {pipeline_mode = #tpu.pipeline_mode<synchronous>, transform_indices = @transform_3, window_bounds = array<i64: 32, 32>}, {pipeline_mode = #tpu.pipeline_mode<synchronous>, transform_indices = @transform_4, window_bounds = array<i64: 32, 64>}, {pipeline_mode = #tpu.pipeline_mode<synchronous>, transform_indices = @transform_5, window_bounds = array<i64: 64, 32>}, {pipeline_mode = #tpu.pipeline_mode<synchronous>, transform_indices = @transform_6, window_bounds = array<i64: 8, 96>}, {transform_indices = @transform_7, window_bounds = array<i64: 1, 1, 32>}]} {
    %c0 = arith.constant 0 : index
    %c0_0 = arith.constant 0 : index
    %c0_1 = arith.constant 0 : index
    %0 = vector.load %arg1[%c0, %c0_0, %c0_1] : memref<1x8x32xf32, #tpu.memory_space<vmem>>, vector<1x8x32xf32>
    %c0_2 = arith.constant 0 : index
    %c0_3 = arith.constant 0 : index
    %c0_4 = arith.constant 0 : index
    %1 = vector.load %arg2[%c0_2, %c0_3, %c0_4] : memref<1x1x8xf32, #tpu.memory_space<vmem>>, vector<1x1x8xf32>
    %c0_5 = arith.constant 0 : index
    %c0_6 = arith.constant 0 : index
    %2 = vector.load %arg7[%c0_5, %c0_6] : memref<8x96xf32, #tpu.memory_space<vmem>>, vector<8x96xf32>
    %3 = vector.extract_strided_slice %2 {offsets = [0, 0], sizes = [1, 96], strides = [1, 1]} : vector<8x96xf32> to vector<1x96xf32>
    %4 = vector.extract_strided_slice %2 {offsets = [1, 0], sizes = [1, 32], strides = [1, 1]} : vector<8x96xf32> to vector<1x32xf32>
    %5 = vector.extract_strided_slice %2 {offsets = [2, 0], sizes = [1, 32], strides = [1, 1]} : vector<8x96xf32> to vector<1x32xf32>
    %6 = vector.extract_strided_slice %2 {offsets = [3, 0], sizes = [1, 32], strides = [1, 1]} : vector<8x96xf32> to vector<1x32xf32>
    %7 = vector.extract_strided_slice %2 {offsets = [4, 0], sizes = [1, 64], strides = [1, 1]} : vector<8x96xf32> to vector<1x64xf32>
    %8 = vector.extract_strided_slice %2 {offsets = [5, 0], sizes = [1, 32], strides = [1, 1]} : vector<8x96xf32> to vector<1x32xf32>
    %9 = vector.extract_strided_slice %2 {offsets = [6, 0], sizes = [1, 32], strides = [1, 1]} : vector<8x96xf32> to vector<1x32xf32>
    %10 = vector.extract_strided_slice %2 {offsets = [7, 0], sizes = [1, 32], strides = [1, 1]} : vector<8x96xf32> to vector<1x32xf32>
    %11 = vector.shape_cast %0 : vector<1x8x32xf32> to vector<8x32xf32>
    %c0_7 = arith.constant 0 : index
    %c0_8 = arith.constant 0 : index
    %12 = vector.load %arg3[%c0_7, %c0_8] : memref<32x96xf32, #tpu.memory_space<vmem>>, vector<32x96xf32>
    %cst = arith.constant dense<0.000000e+00> : vector<8x96xf32>
    %13 = tpu.matmul %11, %12, %cst {dimension_numbers = #tpu.dot_dimension_numbers<[1], [0], [0], [1], [0, 0, 1, 1], [], []>} : vector<8x32xf32>, vector<32x96xf32>, vector<8x96xf32> -> vector<8x96xf32>
    %14 = vector.broadcast %3 : vector<1x96xf32> to vector<8x96xf32>
    %15 = arith.addf %13, %14 : vector<8x96xf32>
    %16 = vector.shape_cast %15 : vector<8x96xf32> to vector<1x8x96xf32>
    %17 = vector.extract_strided_slice %16 {offsets = [0, 0, 0], sizes = [1, 1, 32], strides = [1, 1, 1]} : vector<1x8x96xf32> to vector<1x1x32xf32>
    %18 = vector.extract_strided_slice %16 {offsets = [0, 0, 32], sizes = [1, 8, 32], strides = [1, 1, 1]} : vector<1x8x96xf32> to vector<1x8x32xf32>
    %19 = vector.extract_strided_slice %16 {offsets = [0, 0, 64], sizes = [1, 8, 32], strides = [1, 1, 1]} : vector<1x8x96xf32> to vector<1x8x32xf32>
    "tpu.trace_start"() <{level = 10 : i32, message = "bqd,bkd->bqk"}> : () -> ()
    %cst_9 = arith.constant dense<0.000000e+00> : vector<1x1x8xf32>
    %20 = tpu.matmul %17, %18, %cst_9 {dimension_numbers = #tpu.dot_dimension_numbers<[2], [2], [1], [1], [0, 0, 0, 1, 1, 1], [0], [0]>} : vector<1x1x32xf32>, vector<1x8x32xf32>, vector<1x1x8xf32> -> vector<1x1x8xf32>
    "tpu.trace_stop"() : () -> ()
    %cst_10 = arith.constant 0.176776692 : f32
    %21 = vector.broadcast %cst_10 : f32 to vector<1x1x8xf32>
    %22 = arith.mulf %20, %21 : vector<1x1x8xf32>
    %cst_11 = arith.constant 1.000000e+00 : f32
    %23 = vector.broadcast %cst_11 : f32 to vector<1x1x8xf32>
    %24 = arith.subf %23, %1 : vector<1x1x8xf32>
    %cst_12 = arith.constant -1.000000e+09 : f32
    %25 = vector.broadcast %cst_12 : f32 to vector<1x1x8xf32>
    %26 = arith.mulf %25, %24 : vector<1x1x8xf32>
    %27 = arith.addf %22, %26 : vector<1x1x8xf32>
    %cst_13 = arith.constant dense<0xFF800000> : vector<1x1xf32>
    %28 = vector.multi_reduction <maximumf>, %27, %cst_13 [2] : vector<1x1x8xf32> to vector<1x1xf32>
    %29 = vector.shape_cast %28 : vector<1x1xf32> to vector<1x1x1xf32>
    %30 = vector.broadcast %29 : vector<1x1x1xf32> to vector<1x1x8xf32>
    %31 = arith.subf %27, %30 : vector<1x1x8xf32>
    %32 = math.exp %31 : vector<1x1x8xf32>
    %cst_14 = arith.constant dense<0.000000e+00> : vector<1x1xf32>
    %33 = vector.multi_reduction <add>, %32, %cst_14 [2] : vector<1x1x8xf32> to vector<1x1xf32>
    %34 = vector.shape_cast %33 : vector<1x1xf32> to vector<1x1x1xf32>
    %35 = tpu.reciprocal %34 {approx = true} : vector<1x1x1xf32> -> vector<1x1x1xf32>
    %36 = vector.broadcast %35 : vector<1x1x1xf32> to vector<1x1x8xf32>
    %37 = arith.mulf %32, %36 : vector<1x1x8xf32>
    "tpu.trace_start"() <{level = 10 : i32, message = "bqk,bkd->bqd"}> : () -> ()
    %cst_15 = arith.constant dense<0.000000e+00> : vector<1x1x32xf32>
    %38 = tpu.matmul %37, %19, %cst_15 {dimension_numbers = #tpu.dot_dimension_numbers<[2], [1], [1], [2], [0, 0, 0, 1, 1, 2], [0], [0]>} : vector<1x1x8xf32>, vector<1x8x32xf32>, vector<1x1x32xf32> -> vector<1x1x32xf32>
    "tpu.trace_stop"() : () -> ()
    %39 = vector.shape_cast %38 : vector<1x1x32xf32> to vector<1x32xf32>
    %40 = vector.extract_strided_slice %0 {offsets = [0, 0, 0], sizes = [1, 1, 32], strides = [1, 1, 1]} : vector<1x8x32xf32> to vector<1x1x32xf32>
    %41 = vector.shape_cast %40 : vector<1x1x32xf32> to vector<1x32xf32>
    %c0_16 = arith.constant 0 : index
    %c0_17 = arith.constant 0 : index
    %42 = vector.load %arg4[%c0_16, %c0_17] : memref<32x32xf32, #tpu.memory_space<vmem>>, vector<32x32xf32>
    %cst_18 = arith.constant dense<0.000000e+00> : vector<1x32xf32>
    %43 = tpu.matmul %39, %42, %cst_18 {dimension_numbers = #tpu.dot_dimension_numbers<[1], [0], [0], [1], [0, 0, 1, 1], [], []>} : vector<1x32xf32>, vector<32x32xf32>, vector<1x32xf32> -> vector<1x32xf32>
    %44 = arith.addf %43, %4 : vector<1x32xf32>
    %45 = arith.addf %41, %44 : vector<1x32xf32>
    %cst_19 = arith.constant dense<0.000000e+00> : vector<1xf32>
    %46 = vector.multi_reduction <add>, %45, %cst_19 [1] : vector<1x32xf32> to vector<1xf32>
    %47 = vector.shape_cast %46 : vector<1xf32> to vector<1x1xf32>
    %cst_20 = arith.constant 3.200000e+01 : f32
    %48 = vector.broadcast %cst_20 : f32 to vector<1x1xf32>
    %49 = arith.divf %47, %48 : vector<1x1xf32>
    %50 = vector.broadcast %49 : vector<1x1xf32> to vector<1x32xf32>
    %51 = arith.subf %45, %50 : vector<1x32xf32>
    %52 = arith.mulf %51, %51 : vector<1x32xf32>
    %cst_21 = arith.constant dense<0.000000e+00> : vector<1xf32>
    %53 = vector.multi_reduction <add>, %52, %cst_21 [1] : vector<1x32xf32> to vector<1xf32>
    %54 = vector.shape_cast %53 : vector<1xf32> to vector<1x1xf32>
    %cst_22 = arith.constant 3.200000e+01 : f32
    %55 = vector.broadcast %cst_22 : f32 to vector<1x1xf32>
    %56 = arith.divf %54, %55 : vector<1x1xf32>
    %57 = vector.broadcast %49 : vector<1x1xf32> to vector<1x32xf32>
    %58 = arith.subf %45, %57 : vector<1x32xf32>
    %cst_23 = arith.constant 9.99999996E-13 : f32
    %59 = vector.broadcast %cst_23 : f32 to vector<1x1xf32>
    %60 = arith.addf %56, %59 : vector<1x1xf32>
    %61 = math.rsqrt %60 : vector<1x1xf32>
    %62 = vector.broadcast %61 : vector<1x1xf32> to vector<1x32xf32>
    %63 = arith.mulf %58, %62 : vector<1x32xf32>
    %64 = arith.mulf %63, %5 : vector<1x32xf32>
    %65 = arith.addf %64, %6 : vector<1x32xf32>
    %c0_24 = arith.constant 0 : index
    %c0_25 = arith.constant 0 : index
    %66 = vector.load %arg5[%c0_24, %c0_25] : memref<32x64xf32, #tpu.memory_space<vmem>>, vector<32x64xf32>
    %cst_26 = arith.constant dense<0.000000e+00> : vector<1x64xf32>
    %67 = tpu.matmul %65, %66, %cst_26 {dimension_numbers = #tpu.dot_dimension_numbers<[1], [0], [0], [1], [0, 0, 1, 1], [], []>} : vector<1x32xf32>, vector<32x64xf32>, vector<1x64xf32> -> vector<1x64xf32>
    %68 = arith.addf %67, %7 : vector<1x64xf32>
    %69 = arith.mulf %68, %68 : vector<1x64xf32>
    %70 = arith.mulf %68, %69 : vector<1x64xf32>
    %cst_27 = arith.constant 4.471500e-02 : f32
    %71 = vector.broadcast %cst_27 : f32 to vector<1x64xf32>
    %72 = arith.mulf %71, %70 : vector<1x64xf32>
    %73 = arith.addf %68, %72 : vector<1x64xf32>
    %cst_28 = arith.constant 0.797884583 : f32
    %74 = vector.broadcast %cst_28 : f32 to vector<1x64xf32>
    %75 = arith.mulf %74, %73 : vector<1x64xf32>
    %76 = math.tanh %75 : vector<1x64xf32>
    %cst_29 = arith.constant 1.000000e+00 : f32
    %77 = vector.broadcast %cst_29 : f32 to vector<1x64xf32>
    %78 = arith.addf %77, %76 : vector<1x64xf32>
    %cst_30 = arith.constant 5.000000e-01 : f32
    %79 = vector.broadcast %cst_30 : f32 to vector<1x64xf32>
    %80 = arith.mulf %79, %78 : vector<1x64xf32>
    %81 = arith.mulf %68, %80 : vector<1x64xf32>
    %c0_31 = arith.constant 0 : index
    %c0_32 = arith.constant 0 : index
    %82 = vector.load %arg6[%c0_31, %c0_32] : memref<64x32xf32, #tpu.memory_space<vmem>>, vector<64x32xf32>
    %cst_33 = arith.constant dense<0.000000e+00> : vector<1x32xf32>
    %83 = tpu.matmul %81, %82, %cst_33 {dimension_numbers = #tpu.dot_dimension_numbers<[1], [0], [0], [1], [0, 0, 1, 1], [], []>} : vector<1x64xf32>, vector<64x32xf32>, vector<1x32xf32> -> vector<1x32xf32>
    %84 = arith.addf %83, %8 : vector<1x32xf32>
    %85 = arith.addf %65, %84 : vector<1x32xf32>
    %cst_34 = arith.constant dense<0.000000e+00> : vector<1xf32>
    %86 = vector.multi_reduction <add>, %85, %cst_34 [1] : vector<1x32xf32> to vector<1xf32>
    %87 = vector.shape_cast %86 : vector<1xf32> to vector<1x1xf32>
    %cst_35 = arith.constant 3.200000e+01 : f32
    %88 = vector.broadcast %cst_35 : f32 to vector<1x1xf32>
    %89 = arith.divf %87, %88 : vector<1x1xf32>
    %90 = vector.broadcast %89 : vector<1x1xf32> to vector<1x32xf32>
    %91 = arith.subf %85, %90 : vector<1x32xf32>
    %92 = arith.mulf %91, %91 : vector<1x32xf32>
    %cst_36 = arith.constant dense<0.000000e+00> : vector<1xf32>
    %93 = vector.multi_reduction <add>, %92, %cst_36 [1] : vector<1x32xf32> to vector<1xf32>
    %94 = vector.shape_cast %93 : vector<1xf32> to vector<1x1xf32>
    %cst_37 = arith.constant 3.200000e+01 : f32
    %95 = vector.broadcast %cst_37 : f32 to vector<1x1xf32>
    %96 = arith.divf %94, %95 : vector<1x1xf32>
    %97 = vector.broadcast %89 : vector<1x1xf32> to vector<1x32xf32>
    %98 = arith.subf %85, %97 : vector<1x32xf32>
    %cst_38 = arith.constant 9.99999996E-13 : f32
    %99 = vector.broadcast %cst_38 : f32 to vector<1x1xf32>
    %100 = arith.addf %96, %99 : vector<1x1xf32>
    %101 = math.rsqrt %100 : vector<1x1xf32>
    %102 = vector.broadcast %101 : vector<1x1xf32> to vector<1x32xf32>
    %103 = arith.mulf %98, %102 : vector<1x32xf32>
    %104 = arith.mulf %103, %9 : vector<1x32xf32>
    %105 = arith.addf %104, %10 : vector<1x32xf32>
    %c0_39 = arith.constant 0 : index
    %c0_40 = arith.constant 0 : index
    %c0_41 = arith.constant 0 : index
    %106 = vector.load %arg8[%c0_39, %c0_40, %c0_41] : memref<1x1x32xf32, #tpu.memory_space<vmem>>, vector<1x1x32xf32>
    %107 = vector.shape_cast %106 : vector<1x1x32xf32> to vector<1x32xf32>
    %108 = vector.shape_cast %105 : vector<1x32xf32> to vector<1x1x32xf32>
    tpu.vector_store %arg8[%c0_39, %c0_40, %c0_41], %108 {strides = array<i32>} : memref<1x1x32xf32, #tpu.memory_space<vmem>>, vector<1x1x32xf32>,
    return
  }
  func.func @transform_0(%arg0: i32) -> (i32, i32, i32) {
    %c0_i32 = arith.constant 0 : i32
    %c0_i32_0 = arith.constant 0 : i32
    %c0_i32_1 = arith.constant 0 : i32
    return %arg0, %c0_i32, %c0_i32_0 : i32, i32, i32
  }
  func.func @transform_1(%arg0: i32) -> (i32, i32, i32) {
    %c0_i32 = arith.constant 0 : i32
    %c0_i32_0 = arith.constant 0 : i32
    %c0_i32_1 = arith.constant 0 : i32
    return %arg0, %c0_i32, %c0_i32_0 : i32, i32, i32
  }
  func.func @transform_2(%arg0: i32) -> (i32, i32) {
    %c0_i32 = arith.constant 0 : i32
    %c0_i32_0 = arith.constant 0 : i32
    %c0_i32_1 = arith.constant 0 : i32
    return %c0_i32, %c0_i32_0 : i32, i32
  }
  func.func @transform_3(%arg0: i32) -> (i32, i32) {
    %c0_i32 = arith.constant 0 : i32
    %c0_i32_0 = arith.constant 0 : i32
    %c0_i32_1 = arith.constant 0 : i32
    return %c0_i32, %c0_i32_0 : i32, i32
  }
  func.func @transform_4(%arg0: i32) -> (i32, i32) {
    %c0_i32 = arith.constant 0 : i32
    %c0_i32_0 = arith.constant 0 : i32
    %c0_i32_1 = arith.constant 0 : i32
    return %c0_i32, %c0_i32_0 : i32, i32
  }
  func.func @transform_5(%arg0: i32) -> (i32, i32) {
    %c0_i32 = arith.constant 0 : i32
    %c0_i32_0 = arith.constant 0 : i32
    %c0_i32_1 = arith.constant 0 : i32
    return %c0_i32, %c0_i32_0 : i32, i32
  }
  func.func @transform_6(%arg0: i32) -> (i32, i32) {
    %c0_i32 = arith.constant 0 : i32
    %c0_i32_0 = arith.constant 0 : i32
    %c0_i32_1 = arith.constant 0 : i32
    return %c0_i32, %c0_i32_0 : i32, i32
  }
  func.func @transform_7(%arg0: i32) -> (i32, i32, i32) {
    %c0_i32 = arith.constant 0 : i32
    %c0_i32_0 = arith.constant 0 : i32
    %c0_i32_1 = arith.constant 0 : i32
    return %arg0, %c0_i32, %c0_i32_0 : i32, i32, i32
  }
}

</mosaic_0001>

<llo_original>
// kernel: tpu_custom_call.1
$region0: #{tpu_custom_call.1}
  #allocation0 [shape = 'u32[]', space=smem, size = 0x4, offset = 0x4, fixed_abs, tag = 'smem constant byte address 0x4 - core index']
  #allocation1 [shape = 'u32[72,128]{1,0:T(1,128)}', space=vmem, size = 0x9000, scoped, tag = 'internal scratch']
  %s0 = inlined_call_operand.hbm [shape: f32[2,8,32], index: 0, kind: input, shape index: {}]
  %s1 = inlined_call_operand.hbm [shape: f32[2,1,8], index: 1, kind: input, shape index: {}]
  %s2 = inlined_call_operand.vmem [shape: f32[32,96], index: 2, kind: input, shape index: {}]
  %s3 = inlined_call_operand.vmem [shape: f32[32,32], index: 3, kind: input, shape index: {}]
  %s4 = inlined_call_operand.vmem [shape: f32[32,64], index: 4, kind: input, shape index: {}]
  %s5 = inlined_call_operand.vmem [shape: f32[64,32], index: 5, kind: input, shape index: {}]
  %s6 = inlined_call_operand.hbm [shape: f32[8,96], index: 6, kind: input, shape index: {}]
  %s7 = inlined_call_operand.hbm [shape: f32[2,1,32], index: 7, kind: output, shape index: {}]
  %s8 = sld [smem:[#allocation0]]
  $region73: #{tpu_custom_call.1} parent=0
    _
  %s10 = ssub.s32 1, %s8
  %s11 = scalar_select 0, %s10, %s8
  $region1: #{tpu_custom_call.1} parent=0
    #allocation2 [shape = 'u8[8192]{0}', space=vmem, size = 0x2000, scoped, tag = 'input window, operand 0']
    #allocation3 [shape = 's32[2]{0}', space=sflag, size = 0x8, scoped, tag = 'scoped memory for tpu_custom_call.1']
    #allocation4 [shape = 's32[2]{0}', space=sflag, size = 0x8, scoped, tag = 'scoped memory for tpu_custom_call.1']
    #allocation5 [shape = 'u8[1024]{0}', space=vmem, size = 0x400, scoped, tag = 'input window, operand 1']
    #allocation6 [shape = 's32[2]{0}', space=sflag, size = 0x8, scoped, tag = 'scoped memory for tpu_custom_call.1']
    #allocation7 [shape = 'u8[4096]{0}', space=vmem, size = 0x1000, scoped, tag = 'input window, operand 6, single buffered']
    #allocation8 [shape = 'u8[1024]{0}', space=vmem, size = 0x400, scoped, tag = 'output window, operand 0']
    %12 = vsyncpa [#allocation3], 0
    %s13 = scalar_lea.sflag [#allocation3], 1
    %14 = vsyncpa %s13, 0
    %15 = vsyncpa [#allocation6], 0
    %s16 = scalar_lea.sflag [#allocation6], 1
    %17 = vsyncpa %s16, 0
    %18 = vsyncpa [#allocation4], 0
    %s19 = scalar_lea.sflag [#allocation4], 1
    %20 = vsyncpa %s19, 0
    loop: start=0, step=1, limit=4
    $region2: #{tpu_custom_call.1} parent=1 // loop_pre_header
      _
    $region3: #{tpu_custom_call.1} parent=1 // loop_header
      %s22 = sphi 0, %s26
      %p23 = scmp.ge.s32.totalorder %s22, 4
      %s32 = sphi 0, %s34
      %s35 = sphi 0, %s32
      %s36 = sphi 0, %s35
      %s52 = sphi 0, %s36
      %s58 = sphi 0, %s60
      %s61 = sphi 0, %s58
      %s62 = sphi 0, %s61
      %s78 = sphi 0, %s62
      %s82 = sphi 0, %s82
      %s84 = sphi 0, %s82
      %s85 = sphi 0, %s84
      %s99 = sphi 0, %s85
      %s103 = sphi 0, %s103
      %s105 = sphi 0, %s103
      %s106 = sphi 0, %s105
      %s120 = sphi 0, %s106
      %s124 = sphi 0, %s124
      %s126 = sphi 0, %s124
      %s127 = sphi 0, %s126
      %s141 = sphi 0, %s127
      %s145 = sphi 0, %s145
      %s147 = sphi 0, %s145
      %s148 = sphi 0, %s147
      %s162 = sphi 0, %s148
      %s166 = sphi 0, %s166
      %s168 = sphi 0, %s166
      %s169 = sphi 0, %s168
      %s183 = sphi 0, %s169
      %s189 = sphi 0, %s191
      %s192 = sphi 0, %s189
      %s193 = sphi 0, %s192
      %s209 = sphi 0, %s193
    $region4: #{tpu_custom_call.1} parent=1 // loop_header_branch
      %25 = sbr.rel (%p23) target = $region8
    $region5: #{tpu_custom_call.1} parent=1 // loop_body
      %s27 = ssub.s32 %s22, 1
      %s28 = ssub.s32 %s22, 2
      %s29 = sadd.s32 %s22, 1
      %s30 = ssub.s32 %s22, %s29
      %p31 = scmp.eq.s32.totalorder %s30, 0
      %s33 = sadd.s32 %s32, 1
      %s34 = scalar_select %p31, %s32, %s33
      %p37 = pneg %p31
      %p38 = scmp.eq.s32.totalorder %s22, 1
      %p39 = por %p37, %p38
      %p40 = scmp.ne.s32.totalorder %s32, %s35
      %p41 = scmp.eq.s32.totalorder %s22, 0
      %p42 = por %p40, %p41
      %p43 = scmp.ne.s32.totalorder %s32, %s35
      %p44 = scmp.eq.s32.totalorder %s27, 1
      %p45 = por %p43, %p44
      %p46 = scmp.ne.s32.totalorder %s35, %s36
      %p47 = scmp.eq.s32.totalorder %s27, 0
      %p48 = por %p46, %p47
      %p49 = scmp.ne.s32.totalorder %s35, %s36
      %p50 = scmp.eq.s32.totalorder %s28, 1
      %p51 = por %p49, %p50
      %p53 = scmp.ne.s32.totalorder %s36, %s52
      %p54 = scmp.eq.s32.totalorder %s28, 0
      %p55 = por %p53, %p54
      %s56 = ssub.s32 %s22, %s29
      %p57 = scmp.eq.s32.totalorder %s56, 0
      %s59 = sadd.s32 %s58, 1
      %s60 = scalar_select %p57, %s58, %s59
      %p63 = pneg %p57
      %p64 = scmp.eq.s32.totalorder %s22, 1
      %p65 = por %p63, %p64
      %p66 = scmp.ne.s32.totalorder %s58, %s61
      %p67 = scmp.eq.s32.totalorder %s22, 0
      %p68 = por %p66, %p67
      %p69 = scmp.ne.s32.totalorder %s58, %s61
      %p70 = scmp.eq.s32.totalorder %s27, 1
      %p71 = por %p69, %p70
      %p72 = scmp.ne.s32.totalorder %s61, %s62
      %p73 = scmp.eq.s32.totalorder %s27, 0
      %p74 = por %p72, %p73
      %p75 = scmp.ne.s32.totalorder %s61, %s62
      %p76 = scmp.eq.s32.totalorder %s28, 1
      %p77 = por %p75, %p76
      %p79 = scmp.ne.s32.totalorder %s62, %s78
      %p80 = scmp.eq.s32.totalorder %s28, 0
      %p81 = por %p79, %p80
      %s83 = sadd.s32 %s82, 1
      %p86 = scmp.eq.s32.totalorder %s22, 1
      %p87 = scmp.ne.s32.totalorder %s82, %s84
      %p88 = scmp.eq.s32.totalorder %s22, 0
      %p89 = por %p87, %p88
      %p90 = scmp.ne.s32.totalorder %s82, %s84
      %p91 = scmp.eq.s32.totalorder %s27, 1
      %p92 = por %p90, %p91
      %p93 = scmp.ne.s32.totalorder %s84, %s85
      %p94 = scmp.eq.s32.totalorder %s27, 0
      %p95 = por %p93, %p94
      %p96 = scmp.ne.s32.totalorder %s84, %s85
      %p97 = scmp.eq.s32.totalorder %s28, 1
      %p98 = por %p96, %p97
      %p100 = scmp.ne.s32.totalorder %s85, %s99
      %p101 = scmp.eq.s32.totalorder %s28, 0
      %p102 = por %p100, %p101
      %s104 = sadd.s32 %s103, 1
      %p107 = scmp.eq.s32.totalorder %s22, 1
      %p108 = scmp.ne.s32.totalorder %s103, %s105
      %p109 = scmp.eq.s32.totalorder %s22, 0
      %p110 = por %p108, %p109
      %p111 = scmp.ne.s32.totalorder %s103, %s105
      %p112 = scmp.eq.s32.totalorder %s27, 1
      %p113 = por %p111, %p112
      %p114 = scmp.ne.s32.totalorder %s105, %s106
      %p115 = scmp.eq.s32.totalorder %s27, 0
      %p116 = por %p114, %p115
      %p117 = scmp.ne.s32.totalorder %s105, %s106
      %p118 = scmp.eq.s32.totalorder %s28, 1
      %p119 = por %p117, %p118
      %p121 = scmp.ne.s32.totalorder %s106, %s120
      %p122 = scmp.eq.s32.totalorder %s28, 0
      %p123 = por %p121, %p122
      %s125 = sadd.s32 %s124, 1
      %p128 = scmp.eq.s32.totalorder %s22, 1
      %p129 = scmp.ne.s32.totalorder %s124, %s126
      %p130 = scmp.eq.s32.totalorder %s22, 0
      %p131 = por %p129, %p130
      %p132 = scmp.ne.s32.totalorder %s124, %s126
      %p133 = scmp.eq.s32.totalorder %s27, 1
      %p134 = por %p132, %p133
      %p135 = scmp.ne.s32.totalorder %s126, %s127
      %p136 = scmp.eq.s32.totalorder %s27, 0
      %p137 = por %p135, %p136
      %p138 = scmp.ne.s32.totalorder %s126, %s127
      %p139 = scmp.eq.s32.totalorder %s28, 1
      %p140 = por %p138, %p139
      %p142 = scmp.ne.s32.totalorder %s127, %s141
      %p143 = scmp.eq.s32.totalorder %s28, 0
      %p144 = por %p142, %p143
      %s146 = sadd.s32 %s145, 1
      %p149 = scmp.eq.s32.totalorder %s22, 1
      %p150 = scmp.ne.s32.totalorder %s145, %s147
      %p151 = scmp.eq.s32.totalorder %s22, 0
      %p152 = por %p150, %p151
      %p153 = scmp.ne.s32.totalorder %s145, %s147
      %p154 = scmp.eq.s32.totalorder %s27, 1
      %p155 = por %p153, %p154
      %p156 = scmp.ne.s32.totalorder %s147, %s148
      %p157 = scmp.eq.s32.totalorder %s27, 0
      %p158 = por %p156, %p157
      %p159 = scmp.ne.s32.totalorder %s147, %s148
      %p160 = scmp.eq.s32.totalorder %s28, 1
      %p161 = por %p159, %p160
      %p163 = scmp.ne.s32.totalorder %s148, %s162
      %p164 = scmp.eq.s32.totalorder %s28, 0
      %p165 = por %p163, %p164
      %s167 = sadd.s32 %s166, 1
      %p170 = scmp.eq.s32.totalorder %s22, 1
      %p171 = scmp.ne.s32.totalorder %s166, %s168
      %p172 = scmp.eq.s32.totalorder %s22, 0
      %p173 = por %p171, %p172
      %p174 = scmp.ne.s32.totalorder %s166, %s168
      %p175 = scmp.eq.s32.totalorder %s27, 1
      %p176 = por %p174, %p175
      %p177 = scmp.ne.s32.totalorder %s168, %s169
      %p178 = scmp.eq.s32.totalorder %s27, 0
      %p179 = por %p177, %p178
      %p180 = scmp.ne.s32.totalorder %s168, %s169
      %p181 = scmp.eq.s32.totalorder %s28, 1
      %p182 = por %p180, %p181
      %p184 = scmp.ne.s32.totalorder %s169, %s183
      %p185 = scmp.eq.s32.totalorder %s28, 0
      %p186 = por %p184, %p185
      %s187 = ssub.s32 %s22, %s29
      %p188 = scmp.eq.s32.totalorder %s187, 0
      %s190 = sadd.s32 %s189, 1
      %s191 = scalar_select %p188, %s189, %s190
      %p194 = pneg %p188
      %p195 = scmp.eq.s32.totalorder %s22, 1
      %p196 = por %p194, %p195
      %p197 = scmp.ne.s32.totalorder %s189, %s192
      %p198 = scmp.eq.s32.totalorder %s22, 0
      %p199 = por %p197, %p198
      %p200 = scmp.ne.s32.totalorder %s189, %s192
      %p201 = scmp.eq.s32.totalorder %s27, 1
      %p202 = por %p200, %p201
      %p203 = scmp.ne.s32.totalorder %s192, %s193
      %p204 = scmp.eq.s32.totalorder %s27, 0
      %p205 = por %p203, %p204
      %p206 = scmp.ne.s32.totalorder %s192, %s193
      %p207 = scmp.eq.s32.totalorder %s28, 1
      %p208 = por %p206, %p207
      %p210 = scmp.ne.s32.totalorder %s193, %s209
      %p211 = scmp.eq.s32.totalorder %s28, 0
      %p212 = por %p210, %p211
      %p213 = scmp.le.s32.totalorder 1, %s22
      %p214 = scmp.lt.s32.totalorder %s22, 3
      %p215 = pnand %p213, %p214
      %p216 = pneg %p215
      // Predicated region
      $region9: #{tpu_custom_call.1} parent=5 // pred_check
        _
      $region10: #{tpu_custom_call.1} parent=5 // pred_check_branch
        %218 = sbr.rel (%p215) target = $region12
      $region11: #{tpu_custom_call.1} parent=5 // pred_region
        %s219 = ssub.s32 %s22, 1
        // Predicated region
        $region13: #{tpu_custom_call.1} parent=11 // pred_check
          %p220 = pneg %p95
        $region14: #{tpu_custom_call.1} parent=11 // pred_check_branch
          %222 = sbr.rel (%p220) target = $region16
        $region15: #{tpu_custom_call.1} parent=11 // pred_region
          _
        $region16: #{tpu_custom_call.1} parent=11 // pred_fallthru
          _
        // Predicated region
        $region17: #{tpu_custom_call.1} parent=11 // pred_check
          %p223 = pneg %p116
        $region18: #{tpu_custom_call.1} parent=11 // pred_check_branch
          %225 = sbr.rel (%p223) target = $region20
        $region19: #{tpu_custom_call.1} parent=11 // pred_region
          _
        $region20: #{tpu_custom_call.1} parent=11 // pred_fallthru
          _
        // Predicated region
        $region21: #{tpu_custom_call.1} parent=11 // pred_check
          %p226 = pneg %p137
        $region22: #{tpu_custom_call.1} parent=11 // pred_check_branch
          %228 = sbr.rel (%p226) target = $region24
        $region23: #{tpu_custom_call.1} parent=11 // pred_region
          _
        $region24: #{tpu_custom_call.1} parent=11 // pred_fallthru
          _
        // Predicated region
        $region25: #{tpu_custom_call.1} parent=11 // pred_check
          %p229 = pneg %p158
        $region26: #{tpu_custom_call.1} parent=11 // pred_check_branch
          %231 = sbr.rel (%p229) target = $region28
        $region27: #{tpu_custom_call.1} parent=11 // pred_region
          _
        $region28: #{tpu_custom_call.1} parent=11 // pred_fallthru
          _
        // Predicated region
        $region29: #{tpu_custom_call.1} parent=11 // pred_check
          %p232 = pneg %p179
        $region30: #{tpu_custom_call.1} parent=11 // pred_check_branch
          %234 = sbr.rel (%p232) target = $region32
        $region31: #{tpu_custom_call.1} parent=11 // pred_region
          %236 = vsyncadd [#allocation6], 0
          %s238 = sshll.u32 %s6, 4
          %s239 = int_to_ptr.hbm [resolvable:$true] %s238
          %s240 = sshll.u32 [#allocation7], 4
          %s241 = int_to_ptr.vmem [resolvable:$true] %s240
          %243 = dma.hbm_to_vmem [thread:$0]  %s239, 128, %s241, [#allocation6]
        $region32: #{tpu_custom_call.1} parent=11 // pred_fallthru
          _
      $region12: #{tpu_custom_call.1} parent=5 // pred_fallthru
        _
      %p244 = scmp.lt.s32.totalorder %s22, 2
      // Predicated region
      $region33: #{tpu_custom_call.1} parent=5 // pred_check
        %p245 = pneg %p244
      $region34: #{tpu_custom_call.1} parent=5 // pred_check_branch
        %247 = sbr.rel (%p245) target = $region36
      $region35: #{tpu_custom_call.1} parent=5 // pred_region
        // Predicated region
        $region37: #{tpu_custom_call.1} parent=35 // pred_check
          %p248 = pneg %p42
        $region38: #{tpu_custom_call.1} parent=35 // pred_check_branch
          %250 = sbr.rel (%p248) target = $region40
        $region39: #{tpu_custom_call.1} parent=35 // pred_region
          %s251 = sand.u32 %s32, 1
          %s252 = scalar_lea.sflag [#allocation3], %s251
          %s253 = sand.u32 %s32, 1
          %s254 = smul.addr %s253, 8
          %s255 = scalar_lea.vmem [#allocation2], %s254
          %257 = vsyncadd %s252, 0
          %s258 = smul.addr %s22, 8
          %s259 = scalar_lea.hbm %s0, %s258
          %s261 = sshll.u32 %s259, 4
          %s262 = int_to_ptr.hbm [resolvable:$true] %s261
          %s263 = sshll.u32 %s255, 4
          %s264 = int_to_ptr.vmem [resolvable:$true] %s263
          %266 = dma.hbm_to_vmem [thread:$0]  %s262, 128, %s264, %s252
        $region40: #{tpu_custom_call.1} parent=35 // pred_fallthru
          _
        // Predicated region
        $region41: #{tpu_custom_call.1} parent=35 // pred_check
          %p267 = pneg %p68
        $region42: #{tpu_custom_call.1} parent=35 // pred_check_branch
          %269 = sbr.rel (%p267) target = $region44
        $region43: #{tpu_custom_call.1} parent=35 // pred_region
          %s270 = sand.u32 %s22, 1
          %s271 = scalar_lea.sflag [#allocation6], %s270
          %s272 = sand.u32 %s58, 1
          %s273 = scalar_lea.vmem [#allocation5], %s272
          %275 = vsyncadd %s271, 0
          %s276 = scalar_lea.hbm %s1, %s22
          %s278 = sshll.u32 %s276, 4
          %s279 = int_to_ptr.hbm [resolvable:$true] %s278
          %s280 = sshll.u32 %s273, 4
          %s281 = int_to_ptr.vmem [resolvable:$true] %s280
          %283 = dma.hbm_to_vmem [thread:$0]  %s279, 16, %s281, %s271
        $region44: #{tpu_custom_call.1} parent=35 // pred_fallthru
          _
      $region36: #{tpu_custom_call.1} parent=5 // pred_fallthru
        _
      %p284 = scmp.le.s32.totalorder 1, %s22
      %p285 = scmp.lt.s32.totalorder %s22, 3
      %p286 = pnand %p284, %p285
      %p287 = pneg %p286
      // Predicated region
      $region45: #{tpu_custom_call.1} parent=5 // pred_check
        _
      $region46: #{tpu_custom_call.1} parent=5 // pred_check_branch
        %289 = sbr.rel (%p286) target = $region48
      $region47: #{tpu_custom_call.1} parent=5 // pred_region
        %s290 = ssub.s32 %s22, 1
        %s291 = sand.u32 %s35, 1
        %s292 = scalar_lea.sflag [#allocation3], %s291
        %s293 = sand.u32 %s35, 1
        %s294 = smul.addr %s293, 8
        %s295 = scalar_lea.vmem [#allocation2], %s294
        // Predicated region
        $region49: #{tpu_custom_call.1} parent=47 // pred_check
          %p296 = pneg %p48
        $region50: #{tpu_custom_call.1} parent=47 // pred_check_branch
          %298 = sbr.rel (%p296) target = $region52
        $region51: #{tpu_custom_call.1} parent=47 // pred_region
          %300 = dma.done %s292, 128
        $region52: #{tpu_custom_call.1} parent=47 // pred_fallthru
          _
        %s301 = sand.u32 %s27, 1
        %s302 = scalar_lea.sflag [#allocation6], %s301
        %s303 = sand.u32 %s61, 1
        %s304 = scalar_lea.vmem [#allocation5], %s303
        // Predicated region
        $region53: #{tpu_custom_call.1} parent=47 // pred_check
          %p305 = pneg %p74
        $region54: #{tpu_custom_call.1} parent=47 // pred_check_branch
          %307 = sbr.rel (%p305) target = $region56
        $region55: #{tpu_custom_call.1} parent=47 // pred_region
          %309 = dma.done %s302, 16
        $region56: #{tpu_custom_call.1} parent=47 // pred_fallthru
          _
        // Predicated region
        $region57: #{tpu_custom_call.1} parent=47 // pred_check
          %p310 = pneg %p179
        $region58: #{tpu_custom_call.1} parent=47 // pred_check_branch
          %312 = sbr.rel (%p310) target = $region60
        $region59: #{tpu_custom_call.1} parent=47 // pred_region
          %314 = dma.done [#allocation6], 128
        $region60: #{tpu_custom_call.1} parent=47 // pred_fallthru
          _
        %s315 = sand.u32 %s35, 1
        %s316 = scalar_lea.sflag [#allocation3], %s315
        %s317 = sand.u32 %s35, 1
        %s318 = smul.addr %s317, 8
        %s319 = scalar_lea.vmem [#allocation2], %s318
        %p320 = pneg %p48
        %p321 = pneg %p45
        %s322 = sand.u32 %s27, 1
        %s323 = scalar_lea.sflag [#allocation6], %s322
        %s324 = sand.u32 %s61, 1
        %s325 = scalar_lea.vmem [#allocation5], %s324
        %p326 = pneg %p74
        %p327 = pneg %p71
        %p328 = pneg %p95
        %p329 = pneg %p92
        %p330 = pneg %p116
        %p331 = pneg %p113
        %p332 = pneg %p137
        %p333 = pneg %p134
        %p334 = pneg %p158
        %p335 = pneg %p155
        %p336 = pneg %p179
        %p337 = pneg %p176
        %p338 = pneg %p205
        %p339 = pneg %p202
        %s340 = sand.u32 %s192, 1
        %s341 = scalar_lea.sflag [#allocation4], %s340
        %s342 = sand.u32 %s192, 1
        %s343 = scalar_lea.vmem [#allocation8], %s342
        %v344 = vld [vmem:[%s295] sm:$0xff]
        %v345 = vld [vmem:[%s304] sm:$0x1]
        %v346 = vld [vmem:[#allocation7] sm:$0xff]
        %v347 = vld [vmem:[%s2] sm:$0xff]
        %v348 = vld [vmem:[%s2 + $0x8] sm:$0xff]
        %v349 = vld [vmem:[%s2 + $0x10] sm:$0xff]
        %v350 = vld [vmem:[%s2 + $0x18] sm:$0xff]
        %v351 = vperm.slane %v346, 0
        %vm352 = vcmask 261120
        %v354 = vsel %vm352, %v344, 0
        %356 = vmatpush.msra.mxu0 0.0
        %357 = vmatpush.msra.mxu0 0.0
        %358 = vmatpush.msra.mxu0 0.0
        %359 = vmatpush.msra.mxu0 0.0
        %360 = vmatpush.msra.mxu0 0.0
        %361 = vmatpush.msra.mxu0 0.0
        %362 = vmatpush.msra.mxu0 0.0
        %363 = vmatpush.msra.mxu0 0.0
        %364 = vmatpush.msra.mxu0 0.0
        %365 = vmatpush.msra.mxu0 0.0
        %366 = vmatpush.msra.mxu0 0.0
        %367 = vmatpush.msra.mxu0 0.0
        %368 = vmatpush.msra.mxu0 %v350
        %369 = vmatpush.msra.mxu0 %v349
        %370 = vmatpush.msra.mxu0 %v348
        %371 = vmatpush.msra.mxu0 %v347
        %372 = vmatmul.f32.gmra.mxu0 %v354
        %v373 = vpop.f32.mrf.mxu0
        %v374 = vadd.f32 %v351, %v373
        %375 = vdwg.mxu0
        %377 = vrot.lane.b32.xlu0 %v374, 96
        %v378 = vpop.permute.xlu0 %377
        %v379 = vsel %vm352, %v374, 0
        %v381 = vsel %vm352, %v378, 0
        %383 = vmatpush.xpose.msra.mxu0 0.0
        %384 = vmatpush.xpose.msra.mxu0 0.0
        %385 = vmatpush.xpose.msra.mxu0 0.0
        %386 = vmatpush.xpose.msra.mxu0 0.0
        %387 = vmatpush.xpose.msra.mxu0 0.0
        %388 = vmatpush.xpose.msra.mxu0 0.0
        %389 = vmatpush.xpose.msra.mxu0 0.0
        %390 = vmatpush.xpose.msra.mxu0 0.0
        %391 = vmatpush.xpose.msra.mxu0 0.0
        %392 = vmatpush.xpose.msra.mxu0 0.0
        %393 = vmatpush.xpose.msra.mxu0 0.0
        %394 = vmatpush.xpose.msra.mxu0 0.0
        %395 = vmatpush.xpose.msra.mxu0 0.0
        %396 = vmatpush.xpose.msra.mxu0 0.0
        %397 = vmatpush.xpose.msra.mxu0 0.0
        %398 = vmatpush.xpose.msra.mxu0 %v381
        %399 = vmatmul.f32.gmra.mxu0 %v379
        %v400 = vpop.f32.mrf.mxu0
        %v401 = vadd.f32 0.0, %v400
        %402 = vdwg.mxu0
        %v403 = vmul.f32 %v401, 0.17677669
        %v404 = vsub.f32 1.0, %v345
        %v405 = vmul.f32 %v404, -1e+09
        %v406 = vadd.f32 %v403, %v405
        %vm407 = vcmask 57344
        %v408 = vsel %vm407, %v406, -inf
        %409 = vmax.xlane.f32.xlu0 %v408
        %v410 = vpop.xlane.xlu0 %409
        %v411 = vsub.f32 %v406, %v410
        %v412 = vmul.f32 %v411, 1.442695
        %v413 = vpow.pop %v412
        %v414 = vsel %vm407, %v413, 0.0
        %415 = vadd.xlane.f32.xlu0 %v414
        %v416 = vpop.xlane.xlu0 %415
        %v417 = vrcp.pop %v416
        %v418 = vmul.f32 %v413, %v417
        %419 = vrot.lane.b32.xlu0 %v374, 64
        %v420 = vpop.permute.xlu0 %419
        %vm422 = vcmask 64512
        %v424 = vsel %vm422, %v418, 0
        %426 = vmatpush.msra.mxu0 0.0
        %427 = vmatpush.msra.mxu0 0.0
        %428 = vmatpush.msra.mxu0 0.0
        %429 = vmatpush.msra.mxu0 0.0
        %430 = vmatpush.msra.mxu0 0.0
        %431 = vmatpush.msra.mxu0 0.0
        %432 = vmatpush.msra.mxu0 0.0
        %433 = vmatpush.msra.mxu0 0.0
        %434 = vmatpush.msra.mxu0 0.0
        %435 = vmatpush.msra.mxu0 0.0
        %436 = vmatpush.msra.mxu0 0.0
        %437 = vmatpush.msra.mxu0 0.0
        %438 = vmatpush.msra.mxu0 0.0
        %439 = vmatpush.msra.mxu0 0.0
        %440 = vmatpush.msra.mxu0 0.0
        %441 = vmatpush.msra.mxu0 %v420
        %442 = vmatmul.f32.gmra.mxu0 %v424
        %v443 = vpop.f32.mrf.mxu0
        %v444 = vadd.f32 0.0, %v443
        %445 = vdwg.mxu0
        %v446 = vld [vmem:[%s3] sm:$0xff]
        %v447 = vld [vmem:[%s3 + $0x8] sm:$0xff]
        %v448 = vld [vmem:[%s3 + $0x10] sm:$0xff]
        %v449 = vld [vmem:[%s3 + $0x18] sm:$0xff]
        %v451 = vrot.slane %v346, 1
        %v454 = vsel %vm352, %v444, 0
        %456 = vmatpush.msra.mxu0 0.0
        %457 = vmatpush.msra.mxu0 0.0
        %458 = vmatpush.msra.mxu0 0.0
        %459 = vmatpush.msra.mxu0 0.0
        %460 = vmatpush.msra.mxu0 0.0
        %461 = vmatpush.msra.mxu0 0.0
        %462 = vmatpush.msra.mxu0 0.0
        %463 = vmatpush.msra.mxu0 0.0
        %464 = vmatpush.msra.mxu0 0.0
        %465 = vmatpush.msra.mxu0 0.0
        %466 = vmatpush.msra.mxu0 0.0
        %467 = vmatpush.msra.mxu0 0.0
        %468 = vmatpush.msra.mxu0 %v449
        %469 = vmatpush.msra.mxu0 %v448
        %470 = vmatpush.msra.mxu0 %v447
        %471 = vmatpush.msra.mxu0 %v446
        %472 = vmatmul.f32.gmra.mxu0 %v454
        %v473 = vpop.f32.mrf.mxu0
        %v474 = vadd.f32 %v451, %v473
        %475 = vdwg.mxu0
        %v476 = vadd.f32 %v344, %v474
        %vm477 = vcmask 253952
        %v478 = vsel %vm477, %v476, 0.0
        %479 = vadd.xlane.f32.xlu0 %v478
        %v480 = vpop.xlane.xlu0 %479
        %v481 = vrcp.pop 32.0
        %v482 = vmul.f32 32.0, %v481
        %v483 = vsub.f32 1.0, %v482
        %v484 = vmul.f32 %v481, %v483
        %v485 = vadd.f32 %v481, %v484
        %vm486 = vweird.f32 %v481
        %v487 = vsel %vm486, %v481, %v485
        %v488 = vmul.f32 %v480, %v487
        %v489 = vsub.f32 %v476, %v488
        %v490 = vmul.f32 %v489, %v489
        %v491 = vsel %vm477, %v490, 0.0
        %492 = vadd.xlane.f32.xlu0 %v491
        %v493 = vpop.xlane.xlu0 %492
        %v494 = vmul.f32 %v493, %v487
        %v495 = vadd.f32 %v494, 1e-12
        %v496 = vrsqrt.pop %v495
        %v497 = vmul.f32 %v496, %v495
        %v498 = vmul.f32 %v497, %v496
        %v499 = vmul.f32 0.5, %v498
        %v500 = vsub.f32 1.5, %v499
        %v501 = vmul.f32 %v496, %v500
        %vm502 = vweird.f32 %v495
        %vm503 = vweird.f32 %v496
        %vm504 = vmor %vm502, %vm503
        %v505 = vsel %vm504, %v496, %v501
        %v506 = vmul.f32 %v489, %v505
        %v507 = vrot.slane %v346, 2
        %v509 = vmul.f32 %v506, %v507
        %v510 = vrot.slane %v346, 3
        %v512 = vadd.f32 %v509, %v510
        %v513 = vld [vmem:[%s4] sm:$0xff]
        %v514 = vld [vmem:[%s4 + $0x8] sm:$0xff]
        %v515 = vld [vmem:[%s4 + $0x10] sm:$0xff]
        %v516 = vld [vmem:[%s4 + $0x18] sm:$0xff]
        %v517 = vrot.slane %v346, 4
        %v520 = vsel %vm352, %v512, 0
        %522 = vmatpush.msra.mxu0 0.0
        %523 = vmatpush.msra.mxu0 0.0
        %524 = vmatpush.msra.mxu0 0.0
        %525 = vmatpush.msra.mxu0 0.0
        %526 = vmatpush.msra.mxu0 0.0
        %527 = vmatpush.msra.mxu0 0.0
        %528 = vmatpush.msra.mxu0 0.0
        %529 = vmatpush.msra.mxu0 0.0
        %530 = vmatpush.msra.mxu0 0.0
        %531 = vmatpush.msra.mxu0 0.0
        %532 = vmatpush.msra.mxu0 0.0
        %533 = vmatpush.msra.mxu0 0.0
        %534 = vmatpush.msra.mxu0 %v516
        %535 = vmatpush.msra.mxu0 %v515
        %536 = vmatpush.msra.mxu0 %v514
        %537 = vmatpush.msra.mxu0 %v513
        %538 = vmatmul.f32.gmra.mxu0 %v520
        %v539 = vpop.f32.mrf.mxu0
        %v540 = vadd.f32 %v517, %v539
        %541 = vdwg.mxu0
        %v542 = vmul.f32 %v540, %v540
        %v543 = vmul.f32 %v540, %v542
        %v544 = vmul.f32 %v543, 0.044715
        %v545 = vadd.f32 %v540, %v544
        %v546 = vmul.f32 %v545, 0.7978846
        %v547 = vtanh.pop %v546
        %v548 = vadd.f32 %v547, 1.0
        %v549 = vmul.f32 %v548, 0.5
        %v550 = vmul.f32 %v540, %v549
        %v551 = vld [vmem:[%s5] sm:$0xff]
        %v552 = vld [vmem:[%s5 + $0x8] sm:$0xff]
        %v553 = vld [vmem:[%s5 + $0x10] sm:$0xff]
        %v554 = vld [vmem:[%s5 + $0x18] sm:$0xff]
        %v555 = vld [vmem:[%s5 + $0x20] sm:$0xff]
        %v556 = vld [vmem:[%s5 + $0x28] sm:$0xff]
        %v557 = vld [vmem:[%s5 + $0x30] sm:$0xff]
        %v558 = vld [vmem:[%s5 + $0x38] sm:$0xff]
        %v559 = vrot.slane %v346, 5
        %vm561 = vcmask 523264
        %v563 = vsel %vm561, %v550, 0
        %565 = vmatpush.msra.mxu0 0.0
        %566 = vmatpush.msra.mxu0 0.0
        %567 = vmatpush.msra.mxu0 0.0
        %568 = vmatpush.msra.mxu0 0.0
        %569 = vmatpush.msra.mxu0 0.0
        %570 = vmatpush.msra.mxu0 0.0
        %571 = vmatpush.msra.mxu0 0.0
        %572 = vmatpush.msra.mxu0 0.0
        %573 = vmatpush.msra.mxu0 %v558
        %574 = vmatpush.msra.mxu0 %v557
        %575 = vmatpush.msra.mxu0 %v556
        %576 = vmatpush.msra.mxu0 %v555
        %577 = vmatpush.msra.mxu0 %v554
        %578 = vmatpush.msra.mxu0 %v553
        %579 = vmatpush.msra.mxu0 %v552
        %580 = vmatpush.msra.mxu0 %v551
        %581 = vmatmul.f32.gmra.mxu0 %v563
        %v582 = vpop.f32.mrf.mxu0
        %v583 = vadd.f32 %v559, %v582
        %584 = vdwg.mxu0
        %v585 = vadd.f32 %v512, %v583
        %v586 = vsel %vm477, %v585, 0.0
        %587 = vadd.xlane.f32.xlu0 %v586
        %v588 = vpop.xlane.xlu0 %587
        %v589 = vmul.f32 %v588, %v487
        %v590 = vsub.f32 %v585, %v589
        %v591 = vmul.f32 %v590, %v590
        %v592 = vsel %vm477, %v591, 0.0
        %593 = vadd.xlane.f32.xlu0 %v592
        %v594 = vpop.xlane.xlu0 %593
        %v595 = vmul.f32 %v594, %v487
        %v596 = vadd.f32 %v595, 1e-12
        %v597 = vrsqrt.pop %v596
        %v598 = vmul.f32 %v597, %v596
        %v599 = vmul.f32 %v598, %v597
        %v600 = vmul.f32 0.5, %v599
        %v601 = vsub.f32 1.5, %v600
        %v602 = vmul.f32 %v597, %v601
        %vm603 = vweird.f32 %v596
        %vm604 = vweird.f32 %v597
        %vm605 = vmor %vm603, %vm604
        %v606 = vsel %vm605, %v597, %v602
        %v607 = vmul.f32 %v590, %v606
        %v608 = vrot.slane %v346, 6
        %v610 = vmul.f32 %v607, %v608
        %v611 = vrot.slane %v346, 7
        %v613 = vadd.f32 %v610, %v611
        %614 = vst.msk [vmem:[%s343] sm:$0x1] %vm477, %v613
        %s615 = sand.u32 %s192, 1
        %s616 = scalar_lea.sflag [#allocation4], %s615
        %s617 = sand.u32 %s192, 1
        %s618 = scalar_lea.vmem [#allocation8], %s617
        // Predicated region
        $region61: #{tpu_custom_call.1} parent=47 // pred_check
          %p619 = pneg %p202
        $region62: #{tpu_custom_call.1} parent=47 // pred_check_branch
          %621 = sbr.rel (%p619) target = $region64
        $region63: #{tpu_custom_call.1} parent=47 // pred_region
          %623 = vsyncadd %s616, 0
          %s624 = scalar_lea.hbm %s7, %s27
          %s626 = sshll.u32 %s618, 4
          %s627 = int_to_ptr.vmem [resolvable:$true] %s626
          %s628 = sshll.u32 %s624, 4
          %s629 = int_to_ptr.hbm [resolvable:$true] %s628
          %631 = dma.vmem_to_hbm [thread:$0]  %s627, 16, %s629, %s616
        $region64: #{tpu_custom_call.1} parent=47 // pred_fallthru
          _
      $region48: #{tpu_custom_call.1} parent=5 // pred_fallthru
        _
      %p632 = scmp.le.s32.totalorder 2, %s22
      // Predicated region
      $region65: #{tpu_custom_call.1} parent=5 // pred_check
        %p633 = pneg %p632
      $region66: #{tpu_custom_call.1} parent=5 // pred_check_branch
        %635 = sbr.rel (%p633) target = $region68
      $region67: #{tpu_custom_call.1} parent=5 // pred_region
        %s636 = ssub.s32 %s22, 2
        // Predicated region
        $region69: #{tpu_custom_call.1} parent=67 // pred_check
          %p637 = pneg %p208
        $region70: #{tpu_custom_call.1} parent=67 // pred_check_branch
          %639 = sbr.rel (%p637) target = $region72
        $region71: #{tpu_custom_call.1} parent=67 // pred_region
          %s640 = sand.u32 %s193, 1
          %s641 = scalar_lea.sflag [#allocation4], %s640
          %s642 = sand.u32 %s193, 1
          %s643 = scalar_lea.vmem [#allocation8], %s642
          %645 = dma.done %s641, 16
        $region72: #{tpu_custom_call.1} parent=67 // pred_fallthru
          _
      $region68: #{tpu_custom_call.1} parent=5 // pred_fallthru
        _
    $region6: #{tpu_custom_call.1} parent=1 // loop_footer
      %s26 = sadd.s32 1, %s22
    $region7: #{tpu_custom_call.1} parent=1 // loop_footer_branch
      %21 = sbr.rel target = $region3
    $region8: #{tpu_custom_call.1} parent=1 // loop_exit
      _
    %646 = vsyncpa [#allocation3], 1
    %s647 = scalar_lea.sflag [#allocation3], 1
    %648 = vsyncpa %s647, 1
    %649 = vsyncpa [#allocation6], 1
    %s650 = scalar_lea.sflag [#allocation6], 1
    %651 = vsyncpa %s650, 1
    %652 = vsyncpa [#allocation4], 1
    %s653 = scalar_lea.sflag [#allocation4], 1
    %654 = vsyncpa %s653, 1

</llo_original>
